<compile_context>
chip_gen: v7x
topology: tpu7x:2x2x1
jax: 0.10.0
libtpu: 0.0.40
codegen_flags: <defaults>
</compile_context>

<pallas_src>
import jax
import jax.numpy as jnp
from jax.experimental import pallas as pl
from jax.experimental.pallas import tpu as pltpu

IN_DIM = 784
H1, H2, H3 = 256, 128, 64
NUM_CLASSES = 10
LANE = 128


def _round_up(x, m):
    return (x + m - 1) // m * m


def _cdiv(a, b):
    return -(-a // b)


def _mlp_kernel(x_ref, w1_ref, b1_ref, w2_ref, b2_ref,
                w3_ref, b3_ref, w4_ref, b4_ref, mask_ref, o_ref):
    cdt = w1_ref.dtype  # bf16 MXU operands; accumulation + elementwise stay f32

    # x streams from HBM in f32; the cast to bf16 rides the VPU (kernel is HBM-bound).
    x = x_ref[...].astype(cdt)
    h = jnp.maximum(
        jnp.dot(x, w1_ref[...], preferred_element_type=jnp.float32) + b1_ref[...], 0.0)
    h = jnp.maximum(
        jnp.dot(h.astype(cdt), w2_ref[...], preferred_element_type=jnp.float32) + b2_ref[...], 0.0)
    h = jnp.maximum(
        jnp.dot(h.astype(cdt), w3_ref[...], preferred_element_type=jnp.float32) + b3_ref[...], 0.0)
    logits = jnp.maximum(
        jnp.dot(h.astype(cdt), w4_ref[...], preferred_element_type=jnp.float32) + b4_ref[...], 0.0)

    # dropout(p=0.5) -> identity in eval mode.

    # Softmax over the feature axis; lane-padding columns carry a -1e30 additive mask.
    logits = logits + mask_ref[...]
    m = jnp.max(logits, axis=1, keepdims=True)
    e = jnp.exp(logits - m)
    denom = jnp.sum(e, axis=1, keepdims=True)
    o_ref[...] = (e * pl.reciprocal(denom, approx=True)).astype(o_ref.dtype)


def prepare_params(params, *, compute_dtype=jnp.bfloat16):
    """One-time cast/pad of the parameters (hoisted out of the forward pass)."""
    n_cls = params["w4"].shape[1]
    n_pad = _round_up(max(n_cls, LANE), LANE)   # 10 -> 128 (lane-dense output)
    mask = jnp.where(jnp.arange(n_pad)[None, :] < n_cls,
                     jnp.float32(0.0), jnp.float32(-1e30))
    return {
        "w1": params["w1"].astype(compute_dtype),                       # (784, 256), no K pad
        "w2": params["w2"].astype(compute_dtype),
        "w3": params["w3"].astype(compute_dtype),
        "w4": jnp.pad(params["w4"].astype(compute_dtype), ((0, 0), (0, n_pad - n_cls))),
        "b1": params["b1"].astype(jnp.float32),
        "b2": params["b2"].astype(jnp.float32),
        "b3": params["b3"].astype(jnp.float32),
        "b4": jnp.pad(params["b4"].astype(jnp.float32), ((0, 0), (0, n_pad - n_cls))),
        "mask": mask,
    }


def sequential_forward(x, prepped, num_classes, *, tile_b=1024):
    """x: (B, 784) f32.  prepped: output of prepare_params()."""
    B, in_dim = x.shape
    assert in_dim == IN_DIM
    n_pad = prepped["w4"].shape[1]

    # Batch tiling: clamp tile to the batch, keep it 8-aligned, and for large batches
    # keep >= 2 grid steps so the "parallel" axis shards across v7x's two TensorCores.
    b_aligned = _round_up(B, 8)
    tb = max(8, _round_up(min(tile_b, b_aligned), 8))
    num_tiles = max(1, _cdiv(b_aligned, tb))
    if num_tiles == 1 and b_aligned > 8:
        num_tiles = 2
    tb = _round_up(_cdiv(b_aligned, num_tiles), 8)
    b_pad = tb * num_tiles

    xp = x if b_pad == B else jnp.pad(x, ((0, b_pad - B), (0, 0)))   # f32, K stays 784

    full = lambda arr: pl.BlockSpec(arr.shape, lambda i: (0, 0))     # resident operands

    out = pl.pallas_call(
        _mlp_kernel,
        out_shape=jax.ShapeDtypeStruct((b_pad, n_pad), jnp.float32),
        grid_spec=pltpu.PrefetchScalarGridSpec(
            num_scalar_prefetch=0,
            grid=(num_tiles,),
            in_specs=[
                pl.BlockSpec((tb, IN_DIM), lambda i: (i, 0)),        # x tile, unpadded K
                full(prepped["w1"]), full(prepped["b1"]),
                full(prepped["w2"]), full(prepped["b2"]),
                full(prepped["w3"]), full(prepped["b3"]),
                full(prepped["w4"]), full(prepped["b4"]),
                full(prepped["mask"]),
            ],
            out_specs=pl.BlockSpec((tb, n_pad), lambda i: (i, 0)),
        ),
        compiler_params=pltpu.CompilerParams(
            dimension_semantics=("parallel",),
            vmem_limit_bytes=48 * 1024 * 1024,   # headroom for v5e's 16 MiB scoped default
        ),
    )(xp, prepped["w1"], prepped["b1"], prepped["w2"], prepped["b2"],
      prepped["w3"], prepped["b3"], prepped["w4"], prepped["b4"], prepped["mask"])

    return out[:B, :num_classes]


def init_params(key, num_classes=NUM_CLASSES):
    dims = [(IN_DIM, H1), (H1, H2), (H2, H3), (H3, num_classes)]
    params = {}
    for idx, (din, dout) in enumerate(dims, start=1):
        key, kw, kb = jax.random.split(key, 3)
        bound = 1.0 / jnp.sqrt(din)
        params[f"w{idx}"] = jax.random.uniform(
            kw, (din, dout), jnp.float32, minval=-bound, maxval=bound)
        params[f"b{idx}"] = jax.random.uniform(
            kb, (1, dout), jnp.float32, minval=-bound, maxval=bound)
    return params


def _reference_forward(x, params, *, compute_dtype=jnp.bfloat16):
    h = x
    for idx in range(1, 5):
        w = params[f"w{idx}"].astype(compute_dtype)
        b = params[f"b{idx}"].astype(jnp.float32)
        h = jnp.maximum(
            jnp.dot(h.astype(compute_dtype), w, preferred_element_type=jnp.float32) + b, 0.0)
    return jax.nn.softmax(h, axis=1)


if __name__ == "__main__":
    key = jax.random.PRNGKey(0)
    key, kx = jax.random.split(key)
    B = 8
    x = jax.random.normal(kx, (B, IN_DIM), jnp.float32)

    params = init_params(key, NUM_CLASSES)
    prepped = prepare_params(params)

    out = jax.block_until_ready(sequential_forward(x, prepped, NUM_CLASSES))
    ref = _reference_forward(x, params)

    assert out.shape == (B, NUM_CLASSES)
    assert jnp.allclose(out, ref, atol=5e-3), float(jnp.max(jnp.abs(out - ref)))
    assert jnp.allclose(jnp.sum(out, axis=1), 1.0, atol=5e-3)

    print("KERNEL_OK")
</pallas_src>

<mosaic_0001>
module attributes {stable_mosaic.version = 11 : i64} {
  func.func @_mlp_kernel(%arg0: i32, %arg1: memref<8x784xf32, #tpu.memory_space<vmem>>, %arg2: memref<784x256xbf16, #tpu.memory_space<vmem>>, %arg3: memref<1x256xf32, #tpu.memory_space<vmem>>, %arg4: memref<256x128xbf16, #tpu.memory_space<vmem>>, %arg5: memref<1x128xf32, #tpu.memory_space<vmem>>, %arg6: memref<128x64xbf16, #tpu.memory_space<vmem>>, %arg7: memref<1x64xf32, #tpu.memory_space<vmem>>, %arg8: memref<64x128xbf16, #tpu.memory_space<vmem>>, %arg9: memref<1x128xf32, #tpu.memory_space<vmem>>, %arg10: memref<1x128xf32, #tpu.memory_space<vmem>>, %arg11: memref<8x128xf32, #tpu.memory_space<vmem>>) attributes {dimension_semantics = [#tpu.dimension_semantics<parallel>], iteration_bounds = array<i64: 1>, scalar_prefetch = 0 : i64, scratch_operands = 0 : i64, tpu.core_type = #tpu.core_type<tc>, window_params = [{transform_indices = @transform_0, window_bounds = array<i64: 8, 784>}, {pipeline_mode = #tpu.pipeline_mode<synchronous>, transform_indices = @transform_1, window_bounds = array<i64: 784, 256>}, {pipeline_mode = #tpu.pipeline_mode<synchronous>, transform_indices = @transform_2, window_bounds = array<i64: 1, 256>}, {pipeline_mode = #tpu.pipeline_mode<synchronous>, transform_indices = @transform_3, window_bounds = array<i64: 256, 128>}, {pipeline_mode = #tpu.pipeline_mode<synchronous>, transform_indices = @transform_4, window_bounds = array<i64: 1, 128>}, {pipeline_mode = #tpu.pipeline_mode<synchronous>, transform_indices = @transform_5, window_bounds = array<i64: 128, 64>}, {pipeline_mode = #tpu.pipeline_mode<synchronous>, transform_indices = @transform_6, window_bounds = array<i64: 1, 64>}, {pipeline_mode = #tpu.pipeline_mode<synchronous>, transform_indices = @transform_7, window_bounds = array<i64: 64, 128>}, {pipeline_mode = #tpu.pipeline_mode<synchronous>, transform_indices = @transform_8, window_bounds = array<i64: 1, 128>}, {pipeline_mode = #tpu.pipeline_mode<synchronous>, transform_indices = @transform_9, window_bounds = array<i64: 1, 128>}, {transform_indices = @transform_10, window_bounds = array<i64: 8, 128>}]} {
    %c0 = arith.constant 0 : index
    %c0_0 = arith.constant 0 : index
    %0 = vector.load %arg1[%c0, %c0_0] : memref<8x784xf32, #tpu.memory_space<vmem>>, vector<8x784xf32>
    %1 = arith.truncf %0 : vector<8x784xf32> to vector<8x784xbf16>
    %c0_1 = arith.constant 0 : index
    %c0_2 = arith.constant 0 : index
    %2 = vector.load %arg2[%c0_1, %c0_2] : memref<784x256xbf16, #tpu.memory_space<vmem>>, vector<784x256xbf16>
    %cst = arith.constant dense<0.000000e+00> : vector<8x256xf32>
    %3 = tpu.matmul %1, %2, %cst {dimension_numbers = #tpu.dot_dimension_numbers<[1], [0], [0], [1], [0, 0, 1, 1], [], []>} : vector<8x784xbf16>, vector<784x256xbf16>, vector<8x256xf32> -> vector<8x256xf32>
    %c0_3 = arith.constant 0 : index
    %c0_4 = arith.constant 0 : index
    %4 = vector.load %arg3[%c0_3, %c0_4] : memref<1x256xf32, #tpu.memory_space<vmem>>, vector<1x256xf32>
    %5 = vector.broadcast %4 : vector<1x256xf32> to vector<8x256xf32>
    %6 = arith.addf %3, %5 : vector<8x256xf32>
    %cst_5 = arith.constant 0.000000e+00 : f32
    %7 = vector.broadcast %cst_5 : f32 to vector<8x256xf32>
    %8 = arith.maximumf %6, %7 : vector<8x256xf32>
    %9 = arith.truncf %8 : vector<8x256xf32> to vector<8x256xbf16>
    %c0_6 = arith.constant 0 : index
    %c0_7 = arith.constant 0 : index
    %10 = vector.load %arg4[%c0_6, %c0_7] : memref<256x128xbf16, #tpu.memory_space<vmem>>, vector<256x128xbf16>
    %cst_8 = arith.constant dense<0.000000e+00> : vector<8x128xf32>
    %11 = tpu.matmul %9, %10, %cst_8 {dimension_numbers = #tpu.dot_dimension_numbers<[1], [0], [0], [1], [0, 0, 1, 1], [], []>} : vector<8x256xbf16>, vector<256x128xbf16>, vector<8x128xf32> -> vector<8x128xf32>
    %c0_9 = arith.constant 0 : index
    %c0_10 = arith.constant 0 : index
    %12 = vector.load %arg5[%c0_9, %c0_10] : memref<1x128xf32, #tpu.memory_space<vmem>>, vector<1x128xf32>
    %13 = vector.broadcast %12 : vector<1x128xf32> to vector<8x128xf32>
    %14 = arith.addf %11, %13 : vector<8x128xf32>
    %cst_11 = arith.constant 0.000000e+00 : f32
    %15 = vector.broadcast %cst_11 : f32 to vector<8x128xf32>
    %16 = arith.maximumf %14, %15 : vector<8x128xf32>
    %17 = arith.truncf %16 : vector<8x128xf32> to vector<8x128xbf16>
    %c0_12 = arith.constant 0 : index
    %c0_13 = arith.constant 0 : index
    %18 = vector.load %arg6[%c0_12, %c0_13] : memref<128x64xbf16, #tpu.memory_space<vmem>>, vector<128x64xbf16>
    %cst_14 = arith.constant dense<0.000000e+00> : vector<8x64xf32>
    %19 = tpu.matmul %17, %18, %cst_14 {dimension_numbers = #tpu.dot_dimension_numbers<[1], [0], [0], [1], [0, 0, 1, 1], [], []>} : vector<8x128xbf16>, vector<128x64xbf16>, vector<8x64xf32> -> vector<8x64xf32>
    %c0_15 = arith.constant 0 : index
    %c0_16 = arith.constant 0 : index
    %20 = vector.load %arg7[%c0_15, %c0_16] : memref<1x64xf32, #tpu.memory_space<vmem>>, vector<1x64xf32>
    %21 = vector.broadcast %20 : vector<1x64xf32> to vector<8x64xf32>
    %22 = arith.addf %19, %21 : vector<8x64xf32>
    %cst_17 = arith.constant 0.000000e+00 : f32
    %23 = vector.broadcast %cst_17 : f32 to vector<8x64xf32>
    %24 = arith.maximumf %22, %23 : vector<8x64xf32>
    %25 = arith.truncf %24 : vector<8x64xf32> to vector<8x64xbf16>
    %c0_18 = arith.constant 0 : index
    %c0_19 = arith.constant 0 : index
    %26 = vector.load %arg8[%c0_18, %c0_19] : memref<64x128xbf16, #tpu.memory_space<vmem>>, vector<64x128xbf16>
    %cst_20 = arith.constant dense<0.000000e+00> : vector<8x128xf32>
    %27 = tpu.matmul %25, %26, %cst_20 {dimension_numbers = #tpu.dot_dimension_numbers<[1], [0], [0], [1], [0, 0, 1, 1], [], []>} : vector<8x64xbf16>, vector<64x128xbf16>, vector<8x128xf32> -> vector<8x128xf32>
    %c0_21 = arith.constant 0 : index
    %c0_22 = arith.constant 0 : index
    %28 = vector.load %arg9[%c0_21, %c0_22] : memref<1x128xf32, #tpu.memory_space<vmem>>, vector<1x128xf32>
    %29 = vector.broadcast %28 : vector<1x128xf32> to vector<8x128xf32>
    %30 = arith.addf %27, %29 : vector<8x128xf32>
    %cst_23 = arith.constant 0.000000e+00 : f32
    %31 = vector.broadcast %cst_23 : f32 to vector<8x128xf32>
    %32 = arith.maximumf %30, %31 : vector<8x128xf32>
    %c0_24 = arith.constant 0 : index
    %c0_25 = arith.constant 0 : index
    %33 = vector.load %arg10[%c0_24, %c0_25] : memref<1x128xf32, #tpu.memory_space<vmem>>, vector<1x128xf32>
    %34 = vector.broadcast %33 : vector<1x128xf32> to vector<8x128xf32>
    %35 = arith.addf %32, %34 : vector<8x128xf32>
    %cst_26 = arith.constant dense<0xFF800000> : vector<8xf32>
    %36 = vector.multi_reduction <maximumf>, %35, %cst_26 [1] : vector<8x128xf32> to vector<8xf32>
    %37 = vector.shape_cast %36 : vector<8xf32> to vector<8x1xf32>
    %38 = vector.broadcast %37 : vector<8x1xf32> to vector<8x128xf32>
    %39 = arith.subf %35, %38 : vector<8x128xf32>
    %40 = math.exp %39 : vector<8x128xf32>
    %cst_27 = arith.constant dense<0.000000e+00> : vector<8xf32>
    %41 = vector.multi_reduction <add>, %40, %cst_27 [1] : vector<8x128xf32> to vector<8xf32>
    %42 = vector.shape_cast %41 : vector<8xf32> to vector<8x1xf32>
    %43 = tpu.reciprocal %42 {approx = true} : vector<8x1xf32> -> vector<8x1xf32>
    %44 = vector.broadcast %43 : vector<8x1xf32> to vector<8x128xf32>
    %45 = arith.mulf %40, %44 : vector<8x128xf32>
    %c0_28 = arith.constant 0 : index
    %c0_29 = arith.constant 0 : index
    %46 = vector.load %arg11[%c0_28, %c0_29] : memref<8x128xf32, #tpu.memory_space<vmem>>, vector<8x128xf32>
    tpu.vector_store %arg11[%c0_28, %c0_29], %45 {strides = array<i32>} : memref<8x128xf32, #tpu.memory_space<vmem>>, vector<8x128xf32>,
    return
  }
  func.func @transform_0(%arg0: i32) -> (i32, i32) {
    %c0_i32 = arith.constant 0 : i32
    %c0_i32_0 = arith.constant 0 : i32
    return %arg0, %c0_i32 : i32, i32
  }
  func.func @transform_1(%arg0: i32) -> (i32, i32) {
    %c0_i32 = arith.constant 0 : i32
    %c0_i32_0 = arith.constant 0 : i32
    %c0_i32_1 = arith.constant 0 : i32
    return %c0_i32, %c0_i32_0 : i32, i32
  }
  func.func @transform_2(%arg0: i32) -> (i32, i32) {
    %c0_i32 = arith.constant 0 : i32
    %c0_i32_0 = arith.constant 0 : i32
    %c0_i32_1 = arith.constant 0 : i32
    return %c0_i32, %c0_i32_0 : i32, i32
  }
  func.func @transform_3(%arg0: i32) -> (i32, i32) {
    %c0_i32 = arith.constant 0 : i32
    %c0_i32_0 = arith.constant 0 : i32
    %c0_i32_1 = arith.constant 0 : i32
    return %c0_i32, %c0_i32_0 : i32, i32
  }
  func.func @transform_4(%arg0: i32) -> (i32, i32) {
    %c0_i32 = arith.constant 0 : i32
    %c0_i32_0 = arith.constant 0 : i32
    %c0_i32_1 = arith.constant 0 : i32
    return %c0_i32, %c0_i32_0 : i32, i32
  }
  func.func @transform_5(%arg0: i32) -> (i32, i32) {
    %c0_i32 = arith.constant 0 : i32
    %c0_i32_0 = arith.constant 0 : i32
    %c0_i32_1 = arith.constant 0 : i32
    return %c0_i32, %c0_i32_0 : i32, i32
  }
  func.func @transform_6(%arg0: i32) -> (i32, i32) {
    %c0_i32 = arith.constant 0 : i32
    %c0_i32_0 = arith.constant 0 : i32
    %c0_i32_1 = arith.constant 0 : i32
    return %c0_i32, %c0_i32_0 : i32, i32
  }
  func.func @transform_7(%arg0: i32) -> (i32, i32) {
    %c0_i32 = arith.constant 0 : i32
    %c0_i32_0 = arith.constant 0 : i32
    %c0_i32_1 = arith.constant 0 : i32
    return %c0_i32, %c0_i32_0 : i32, i32
  }
  func.func @transform_8(%arg0: i32) -> (i32, i32) {
    %c0_i32 = arith.constant 0 : i32
    %c0_i32_0 = arith.constant 0 : i32
    %c0_i32_1 = arith.constant 0 : i32
    return %c0_i32, %c0_i32_0 : i32, i32
  }
  func.func @transform_9(%arg0: i32) -> (i32, i32) {
    %c0_i32 = arith.constant 0 : i32
    %c0_i32_0 = arith.constant 0 : i32
    %c0_i32_1 = arith.constant 0 : i32
    return %c0_i32, %c0_i32_0 : i32, i32
  }
  func.func @transform_10(%arg0: i32) -> (i32, i32) {
    %c0_i32 = arith.constant 0 : i32
    %c0_i32_0 = arith.constant 0 : i32
    return %arg0, %c0_i32 : i32, i32
  }
}

</mosaic_0001>

<llo_original>
// kernel: tpu_custom_call.1
$region0: #{tpu_custom_call.1}
  #allocation0 [shape = 'u32[]', space=smem, size = 0x4, offset = 0x4, fixed_abs, tag = 'smem constant byte address 0x4 - core index']
  #allocation1 [shape = 'u32[144,128]{1,0:T(1,128)}', space=vmem, size = 0x12000, scoped, tag = 'internal scratch']
  %s0 = inlined_call_operand.vmem [shape: f32[8,784], index: 0, kind: input, shape index: {}]
  %s1 = inlined_call_operand.hbm [shape: bf16[784,256], index: 1, kind: input, shape index: {}]
  %s2 = inlined_call_operand.vmem [shape: f32[1,256], index: 2, kind: input, shape index: {}]
  %s3 = inlined_call_operand.hbm [shape: bf16[256,128], index: 3, kind: input, shape index: {}]
  %s4 = inlined_call_operand.vmem [shape: f32[1,128], index: 4, kind: input, shape index: {}]
  %s5 = inlined_call_operand.vmem [shape: bf16[128,64], index: 5, kind: input, shape index: {}]
  %s6 = inlined_call_operand.vmem [shape: f32[1,64], index: 6, kind: input, shape index: {}]
  %s7 = inlined_call_operand.vmem [shape: bf16[64,128], index: 7, kind: input, shape index: {}]
  %s8 = inlined_call_operand.vmem [shape: f32[1,128], index: 8, kind: input, shape index: {}]
  %s9 = inlined_call_operand.vmem [shape: f32[1,128], index: 9, kind: input, shape index: {}]
  %s10 = inlined_call_operand.hbm [shape: f32[8,128], index: 10, kind: output, shape index: {}]
  %s11 = sld [smem:[#allocation0]]
  $region58: #{tpu_custom_call.1} parent=0
    _
  %s13 = ssub.s32 1, %s11
  %s14 = scalar_select 0, %s13, %s11
  $region1: #{tpu_custom_call.1} parent=0
    #allocation2 [shape = 'u8[401408]{0}', space=vmem, size = 0x62000, scoped, tag = 'input window, operand 1, single buffered']
    #allocation3 [shape = 's32[1]{0}', space=sflag, size = 0x4, scoped, tag = 'scoped memory for tpu_custom_call.1']
    #allocation4 [shape = 's32[1]{0}', space=sflag, size = 0x4, scoped, tag = 'scoped memory for tpu_custom_call.1']
    #allocation5 [shape = 'u8[65536]{0}', space=vmem, size = 0x10000, scoped, tag = 'input window, operand 3, single buffered']
    #allocation6 [shape = 's32[1]{0}', space=sflag, size = 0x4, scoped, tag = 'scoped memory for tpu_custom_call.1']
    #allocation7 [shape = 'u8[4096]{0}', space=vmem, size = 0x1000, scoped, tag = 'output window, operand 0, single buffered']
    %15 = vsyncpa [#allocation3], 0
    %16 = vsyncpa [#allocation6], 0
    %17 = vsyncpa [#allocation4], 0
    // Predicated region
    $region2: #{tpu_custom_call.1} parent=1 // pred_check
      _
    $region3: #{tpu_custom_call.1} parent=1 // pred_check_branch
      %19 = sbr.rel (0) target = $region5
    $region4: #{tpu_custom_call.1} parent=1 // pred_region
      _
    $region5: #{tpu_custom_call.1} parent=1 // pred_fallthru
      _
    // Predicated region
    $region6: #{tpu_custom_call.1} parent=1 // pred_check
      _
    $region7: #{tpu_custom_call.1} parent=1 // pred_check_branch
      %21 = sbr.rel (0) target = $region9
    $region8: #{tpu_custom_call.1} parent=1 // pred_region
      %s23 = ssub.s32 12544, 12544
      %24 = vsyncadd [#allocation3], %s23
      %s25 = sshll.u32 [#allocation2], 4
      %s26 = int_to_ptr.vmem [resolvable:$true] %s25
      %31 = dma.hbm_to_vmem [thread:$0]  %s1, 12544, %s26, [#allocation3], 128, 128, 8
    $region9: #{tpu_custom_call.1} parent=1 // pred_fallthru
      _
    // Predicated region
    $region10: #{tpu_custom_call.1} parent=1 // pred_check
      _
    $region11: #{tpu_custom_call.1} parent=1 // pred_check_branch
      %33 = sbr.rel (0) target = $region13
    $region12: #{tpu_custom_call.1} parent=1 // pred_region
      _
    $region13: #{tpu_custom_call.1} parent=1 // pred_fallthru
      _
    // Predicated region
    $region14: #{tpu_custom_call.1} parent=1 // pred_check
      _
    $region15: #{tpu_custom_call.1} parent=1 // pred_check_branch
      %35 = sbr.rel (0) target = $region17
    $region16: #{tpu_custom_call.1} parent=1 // pred_region
      %s37 = ssub.s32 2048, 2048
      %38 = vsyncadd [#allocation6], %s37
      %s39 = sshll.u32 [#allocation5], 4
      %s40 = int_to_ptr.vmem [resolvable:$true] %s39
      %45 = dma.hbm_to_vmem [thread:$0]  %s3, 2048, %s40, [#allocation6], 64, 64, 4
    $region17: #{tpu_custom_call.1} parent=1 // pred_fallthru
      _
    // Predicated region
    $region18: #{tpu_custom_call.1} parent=1 // pred_check
      _
    $region19: #{tpu_custom_call.1} parent=1 // pred_check_branch
      %47 = sbr.rel (0) target = $region21
    $region20: #{tpu_custom_call.1} parent=1 // pred_region
      _
    $region21: #{tpu_custom_call.1} parent=1 // pred_fallthru
      _
    // Predicated region
    $region22: #{tpu_custom_call.1} parent=1 // pred_check
      _
    $region23: #{tpu_custom_call.1} parent=1 // pred_check_branch
      %49 = sbr.rel (0) target = $region25
    $region24: #{tpu_custom_call.1} parent=1 // pred_region
      _
    $region25: #{tpu_custom_call.1} parent=1 // pred_fallthru
      _
    // Predicated region
    $region26: #{tpu_custom_call.1} parent=1 // pred_check
      _
    $region27: #{tpu_custom_call.1} parent=1 // pred_check_branch
      %51 = sbr.rel (0) target = $region29
    $region28: #{tpu_custom_call.1} parent=1 // pred_region
      _
    $region29: #{tpu_custom_call.1} parent=1 // pred_fallthru
      _
    // Predicated region
    $region30: #{tpu_custom_call.1} parent=1 // pred_check
      _
    $region31: #{tpu_custom_call.1} parent=1 // pred_check_branch
      %53 = sbr.rel (0) target = $region33
    $region32: #{tpu_custom_call.1} parent=1 // pred_region
      _
    $region33: #{tpu_custom_call.1} parent=1 // pred_fallthru
      _
    // Predicated region
    $region34: #{tpu_custom_call.1} parent=1 // pred_check
      _
    $region35: #{tpu_custom_call.1} parent=1 // pred_check_branch
      %55 = sbr.rel (0) target = $region37
    $region36: #{tpu_custom_call.1} parent=1 // pred_region
      _
    $region37: #{tpu_custom_call.1} parent=1 // pred_fallthru
      _
    // Predicated region
    $region38: #{tpu_custom_call.1} parent=1 // pred_check
      _
    $region39: #{tpu_custom_call.1} parent=1 // pred_check_branch
      %57 = sbr.rel (0) target = $region41
    $region40: #{tpu_custom_call.1} parent=1 // pred_region
      _
    $region41: #{tpu_custom_call.1} parent=1 // pred_fallthru
      _
    // Predicated region
    $region42: #{tpu_custom_call.1} parent=1 // pred_check
      _
    $region43: #{tpu_custom_call.1} parent=1 // pred_check_branch
      %59 = sbr.rel (0) target = $region45
    $region44: #{tpu_custom_call.1} parent=1 // pred_region
      %60 = dma.done [#allocation3], 12544
    $region45: #{tpu_custom_call.1} parent=1 // pred_fallthru
      _
    // Predicated region
    $region46: #{tpu_custom_call.1} parent=1 // pred_check
      _
    $region47: #{tpu_custom_call.1} parent=1 // pred_check_branch
      %62 = sbr.rel (0) target = $region49
    $region48: #{tpu_custom_call.1} parent=1 // pred_region
      %63 = dma.done [#allocation6], 2048
    $region49: #{tpu_custom_call.1} parent=1 // pred_fallthru
      _
    %v65 = vld [vmem:[%s0] sm:$0xff]
    %v66 = vld [vmem:[%s0 + $0x8] sm:$0xff]
    %v67 = vld [vmem:[%s0 + $0x10] sm:$0xff]
    %v68 = vld [vmem:[%s0 + $0x18] sm:$0xff]
    %v69 = vld [vmem:[%s0 + $0x20] sm:$0xff]
    %v70 = vld [vmem:[%s0 + $0x28] sm:$0xff]
    %v71 = vld [vmem:[%s0 + $0x30] sm:$0xff]
    %v72 = vpack.c.bf16 %v65, %v65
    %v73 = vpack.c.bf16 %v66, %v66
    %v74 = vpack.c.bf16 %v67, %v67
    %v75 = vpack.c.bf16 %v68, %v68
    %v76 = vpack.c.bf16 %v69, %v69
    %v77 = vpack.c.bf16 %v70, %v70
    %v78 = vpack.c.bf16 %v71, %v71
    %v79 = vld [vmem:[#allocation2] sm:$0xff]
    %v80 = vld [vmem:[#allocation2 + $0x8] sm:$0xff]
    %v81 = vld [vmem:[#allocation2 + $0x10] sm:$0xff]
    %v82 = vld [vmem:[#allocation2 + $0x18] sm:$0xff]
    %v83 = vld [vmem:[#allocation2 + $0x20] sm:$0xff]
    %v84 = vld [vmem:[#allocation2 + $0x28] sm:$0xff]
    %v85 = vld [vmem:[#allocation2 + $0x30] sm:$0xff]
    %v86 = vld [vmem:[#allocation2 + $0x38] sm:$0xff]
    %v87 = vld [vmem:[#allocation2 + $0x40] sm:$0xff]
    %v88 = vld [vmem:[#allocation2 + $0x48] sm:$0xff]
    %v89 = vld [vmem:[#allocation2 + $0x50] sm:$0xff]
    %v90 = vld [vmem:[#allocation2 + $0x58] sm:$0xff]
    %v91 = vld [vmem:[#allocation2 + $0x60] sm:$0xff]
    %v92 = vld [vmem:[#allocation2 + $0x68] sm:$0xff]
    %v93 = vld [vmem:[#allocation2 + $0x70] sm:$0xff]
    %v94 = vld [vmem:[#allocation2 + $0x78] sm:$0xff]
    %v95 = vld [vmem:[#allocation2 + $0x80] sm:$0xff]
    %v96 = vld [vmem:[#allocation2 + $0x88] sm:$0xff]
    %v97 = vld [vmem:[#allocation2 + $0x90] sm:$0xff]
    %v98 = vld [vmem:[#allocation2 + $0x98] sm:$0xff]
    %v99 = vld [vmem:[#allocation2 + $0xa0] sm:$0xff]
    %v100 = vld [vmem:[#allocation2 + $0xa8] sm:$0xff]
    %v101 = vld [vmem:[#allocation2 + $0xb0] sm:$0xff]
    %v102 = vld [vmem:[#allocation2 + $0xb8] sm:$0xff]
    %v103 = vld [vmem:[#allocation2 + $0xc0] sm:$0xff]
    %v104 = vld [vmem:[#allocation2 + $0xc8] sm:$0xff]
    %v105 = vld [vmem:[#allocation2 + $0xd0] sm:$0xff]
    %v106 = vld [vmem:[#allocation2 + $0xd8] sm:$0xff]
    %v107 = vld [vmem:[#allocation2 + $0xe0] sm:$0xff]
    %v108 = vld [vmem:[#allocation2 + $0xe8] sm:$0xff]
    %v109 = vld [vmem:[#allocation2 + $0xf0] sm:$0xff]
    %v110 = vld [vmem:[#allocation2 + $0xf8] sm:$0xff]
    %v111 = vld [vmem:[#allocation2 + $0x100] sm:$0xff]
    %v112 = vld [vmem:[#allocation2 + $0x108] sm:$0xff]
    %v113 = vld [vmem:[#allocation2 + $0x110] sm:$0xff]
    %v114 = vld [vmem:[#allocation2 + $0x118] sm:$0xff]
    %v115 = vld [vmem:[#allocation2 + $0x120] sm:$0xff]
    %v116 = vld [vmem:[#allocation2 + $0x128] sm:$0xff]
    %v117 = vld [vmem:[#allocation2 + $0x130] sm:$0xff]
    %v118 = vld [vmem:[#allocation2 + $0x138] sm:$0xff]
    %v119 = vld [vmem:[#allocation2 + $0x140] sm:$0xff]
    %v120 = vld [vmem:[#allocation2 + $0x148] sm:$0xff]
    %v121 = vld [vmem:[#allocation2 + $0x150] sm:$0xff]
    %v122 = vld [vmem:[#allocation2 + $0x158] sm:$0xff]
    %v123 = vld [vmem:[#allocation2 + $0x160] sm:$0xff]
    %v124 = vld [vmem:[#allocation2 + $0x168] sm:$0xff]
    %v125 = vld [vmem:[#allocation2 + $0x170] sm:$0xff]
    %v126 = vld [vmem:[#allocation2 + $0x178] sm:$0xff]
    %v127 = vld [vmem:[#allocation2 + $0x180] sm:$0xff]
    %v128 = vld [vmem:[#allocation2 + $0x188] sm:$0xff]
    %v129 = vld [vmem:[#allocation2 + $0x190] sm:$0xff]
    %v130 = vld [vmem:[#allocation2 + $0x198] sm:$0xff]
    %v131 = vld [vmem:[#allocation2 + $0x1a0] sm:$0xff]
    %v132 = vld [vmem:[#allocation2 + $0x1a8] sm:$0xff]
    %v133 = vld [vmem:[#allocation2 + $0x1b0] sm:$0xff]
    %v134 = vld [vmem:[#allocation2 + $0x1b8] sm:$0xff]
    %v135 = vld [vmem:[#allocation2 + $0x1c0] sm:$0xff]
    %v136 = vld [vmem:[#allocation2 + $0x1c8] sm:$0xff]
    %v137 = vld [vmem:[#allocation2 + $0x1d0] sm:$0xff]
    %v138 = vld [vmem:[#allocation2 + $0x1d8] sm:$0xff]
    %v139 = vld [vmem:[#allocation2 + $0x1e0] sm:$0xff]
    %v140 = vld [vmem:[#allocation2 + $0x1e8] sm:$0xff]
    %v141 = vld [vmem:[#allocation2 + $0x1f0] sm:$0xff]
    %v142 = vld [vmem:[#allocation2 + $0x1f8] sm:$0xff]
    %v143 = vld [vmem:[#allocation2 + $0x200] sm:$0xff]
    %v144 = vld [vmem:[#allocation2 + $0x208] sm:$0xff]
    %v145 = vld [vmem:[#allocation2 + $0x210] sm:$0xff]
    %v146 = vld [vmem:[#allocation2 + $0x218] sm:$0xff]
    %v147 = vld [vmem:[#allocation2 + $0x220] sm:$0xff]
    %v148 = vld [vmem:[#allocation2 + $0x228] sm:$0xff]
    %v149 = vld [vmem:[#allocation2 + $0x230] sm:$0xff]
    %v150 = vld [vmem:[#allocation2 + $0x238] sm:$0xff]
    %v151 = vld [vmem:[#allocation2 + $0x240] sm:$0xff]
    %v152 = vld [vmem:[#allocation2 + $0x248] sm:$0xff]
    %v153 = vld [vmem:[#allocation2 + $0x250] sm:$0xff]
    %v154 = vld [vmem:[#allocation2 + $0x258] sm:$0xff]
    %v155 = vld [vmem:[#allocation2 + $0x260] sm:$0xff]
    %v156 = vld [vmem:[#allocation2 + $0x268] sm:$0xff]
    %v157 = vld [vmem:[#allocation2 + $0x270] sm:$0xff]
    %v158 = vld [vmem:[#allocation2 + $0x278] sm:$0xff]
    %v159 = vld [vmem:[#allocation2 + $0x280] sm:$0xff]
    %v160 = vld [vmem:[#allocation2 + $0x288] sm:$0xff]
    %v161 = vld [vmem:[#allocation2 + $0x290] sm:$0xff]
    %v162 = vld [vmem:[#allocation2 + $0x298] sm:$0xff]
    %v163 = vld [vmem:[#allocation2 + $0x2a0] sm:$0xff]
    %v164 = vld [vmem:[#allocation2 + $0x2a8] sm:$0xff]
    %v165 = vld [vmem:[#allocation2 + $0x2b0] sm:$0xff]
    %v166 = vld [vmem:[#allocation2 + $0x2b8] sm:$0xff]
    %v167 = vld [vmem:[#allocation2 + $0x2c0] sm:$0xff]
    %v168 = vld [vmem:[#allocation2 + $0x2c8] sm:$0xff]
    %v169 = vld [vmem:[#allocation2 + $0x2d0] sm:$0xff]
    %v170 = vld [vmem:[#allocation2 + $0x2d8] sm:$0xff]
    %v171 = vld [vmem:[#allocation2 + $0x2e0] sm:$0xff]
    %v172 = vld [vmem:[#allocation2 + $0x2e8] sm:$0xff]
    %v173 = vld [vmem:[#allocation2 + $0x2f0] sm:$0xff]
    %v174 = vld [vmem:[#allocation2 + $0x2f8] sm:$0xff]
    %v175 = vld [vmem:[#allocation2 + $0x300] sm:$0xff]
    %v176 = vld [vmem:[#allocation2 + $0x308] sm:$0xff]
    %v177 = vld [vmem:[%s2] sm:$0x3]
    %v179 = vlaneseq
    %v180 = vshrl.u32 %v179, 7
    %v181 = vsub.s32 0, %v180
    %v182 = vrot.slane %v177, %v181
    %v183 = vlaneseq
    %v184 = vshrl.u32 %v183, 7
    %v185 = vsub.s32 1, %v184
    %v186 = vrot.slane %v177, %v185
    %v287 = vunpack.c.l.b16 %v79
    %v288 = vunpack.c.h.b16 %v79
    %v289 = vunpack.c.l.b16 %v80
    %v290 = vunpack.c.h.b16 %v80
    %v291 = vunpack.c.l.b16 %v81
    %v292 = vunpack.c.h.b16 %v81
    %v293 = vunpack.c.l.b16 %v82
    %v294 = vunpack.c.h.b16 %v82
    %v295 = vunpack.c.l.b16 %v83
    %v296 = vunpack.c.h.b16 %v83
    %v297 = vunpack.c.l.b16 %v84
    %v298 = vunpack.c.h.b16 %v84
    %v299 = vunpack.c.l.b16 %v85
    %v300 = vunpack.c.h.b16 %v85
    %v301 = vunpack.c.l.b16 %v86
    %v302 = vunpack.c.h.b16 %v86
    %v303 = vunpack.c.l.b16 %v87
    %v304 = vunpack.c.h.b16 %v87
    %v305 = vunpack.c.l.b16 %v88
    %v306 = vunpack.c.h.b16 %v88
    %v307 = vunpack.c.l.b16 %v89
    %v308 = vunpack.c.h.b16 %v89
    %v309 = vunpack.c.l.b16 %v90
    %v310 = vunpack.c.h.b16 %v90
    %v311 = vunpack.c.l.b16 %v91
    %v312 = vunpack.c.h.b16 %v91
    %v313 = vunpack.c.l.b16 %v92
    %v314 = vunpack.c.h.b16 %v92
    %v315 = vunpack.c.l.b16 %v93
    %v316 = vunpack.c.h.b16 %v93
    %v317 = vunpack.c.l.b16 %v94
    %v318 = vunpack.c.h.b16 %v94
    %v319 = vunpack.c.l.b16 %v95
    %v320 = vunpack.c.h.b16 %v95
    %v321 = vunpack.c.l.b16 %v96
    %v322 = vunpack.c.h.b16 %v96
    %v323 = vunpack.c.l.b16 %v97
    %v324 = vunpack.c.h.b16 %v97
    %v325 = vunpack.c.l.b16 %v98
    %v326 = vunpack.c.h.b16 %v98
    %v327 = vunpack.c.l.b16 %v99
    %v328 = vunpack.c.h.b16 %v99
    %v329 = vunpack.c.l.b16 %v100
    %v330 = vunpack.c.h.b16 %v100
    %v331 = vunpack.c.l.b16 %v101
    %v332 = vunpack.c.h.b16 %v101
    %v333 = vunpack.c.l.b16 %v102
    %v334 = vunpack.c.h.b16 %v102
    %v335 = vunpack.c.l.b16 %v103
    %v336 = vunpack.c.h.b16 %v103
    %v337 = vunpack.c.l.b16 %v104
    %v338 = vunpack.c.h.b16 %v104
    %v339 = vunpack.c.l.b16 %v105
    %v340 = vunpack.c.h.b16 %v105
    %v341 = vunpack.c.l.b16 %v106
    %v342 = vunpack.c.h.b16 %v106
    %v343 = vunpack.c.l.b16 %v107
    %v344 = vunpack.c.h.b16 %v107
    %v345 = vunpack.c.l.b16 %v108
    %v346 = vunpack.c.h.b16 %v108
    %v347 = vunpack.c.l.b16 %v109
    %v348 = vunpack.c.h.b16 %v109
    %v349 = vunpack.c.l.b16 %v110
    %v350 = vunpack.c.h.b16 %v110
    %v351 = vunpack.c.l.b16 %v111
    %v352 = vunpack.c.h.b16 %v111
    %v353 = vunpack.c.l.b16 %v112
    %v354 = vunpack.c.h.b16 %v112
    %v355 = vunpack.c.l.b16 %v113
    %v356 = vunpack.c.h.b16 %v113
    %v357 = vunpack.c.l.b16 %v114
    %v358 = vunpack.c.h.b16 %v114
    %v359 = vunpack.c.l.b16 %v115
    %v360 = vunpack.c.h.b16 %v115
    %v361 = vunpack.c.l.b16 %v116
    %v362 = vunpack.c.h.b16 %v116
    %v363 = vunpack.c.l.b16 %v117
    %v364 = vunpack.c.h.b16 %v117
    %v365 = vunpack.c.l.b16 %v118
    %v366 = vunpack.c.h.b16 %v118
    %v367 = vunpack.c.l.b16 %v119
    %v368 = vunpack.c.h.b16 %v119
    %v369 = vunpack.c.l.b16 %v120
    %v370 = vunpack.c.h.b16 %v120
    %v371 = vunpack.c.l.b16 %v121
    %v372 = vunpack.c.h.b16 %v121
    %v373 = vunpack.c.l.b16 %v122
    %v374 = vunpack.c.h.b16 %v122
    %v375 = vunpack.c.l.b16 %v123
    %v376 = vunpack.c.h.b16 %v123
    %v377 = vunpack.c.l.b16 %v124
    %v378 = vunpack.c.h.b16 %v124
    %v379 = vunpack.c.l.b16 %v125
    %v380 = vunpack.c.h.b16 %v125
    %v381 = vunpack.c.l.b16 %v126
    %v382 = vunpack.c.h.b16 %v126
    %v383 = vunpack.c.l.b16 %v127
    %v384 = vunpack.c.h.b16 %v127
    %v385 = vunpack.c.l.b16 %v128
    %v386 = vunpack.c.h.b16 %v128
    %v387 = vunpack.c.l.b16 %v129
    %v388 = vunpack.c.h.b16 %v129
    %v389 = vunpack.c.l.b16 %v130
    %v390 = vunpack.c.h.b16 %v130
    %v391 = vunpack.c.l.b16 %v131
    %v392 = vunpack.c.h.b16 %v131
    %v393 = vunpack.c.l.b16 %v132
    %v394 = vunpack.c.h.b16 %v132
    %v395 = vunpack.c.l.b16 %v133
    %v396 = vunpack.c.h.b16 %v133
    %v397 = vunpack.c.l.b16 %v134
    %v398 = vunpack.c.h.b16 %v134
    %v399 = vunpack.c.l.b16 %v135
    %v400 = vunpack.c.h.b16 %v135
    %v401 = vunpack.c.l.b16 %v136
    %v402 = vunpack.c.h.b16 %v136
    %v403 = vunpack.c.l.b16 %v137
    %v404 = vunpack.c.h.b16 %v137
    %v405 = vunpack.c.l.b16 %v138
    %v406 = vunpack.c.h.b16 %v138
    %v407 = vunpack.c.l.b16 %v139
    %v408 = vunpack.c.h.b16 %v139
    %v409 = vunpack.c.l.b16 %v140
    %v410 = vunpack.c.h.b16 %v140
    %v411 = vunpack.c.l.b16 %v141
    %v412 = vunpack.c.h.b16 %v141
    %v413 = vunpack.c.l.b16 %v142
    %v414 = vunpack.c.h.b16 %v142
    %v415 = vunpack.c.l.b16 %v143
    %v416 = vunpack.c.h.b16 %v143
    %v417 = vunpack.c.l.b16 %v144
    %v418 = vunpack.c.h.b16 %v144
    %v419 = vunpack.c.l.b16 %v145
    %v420 = vunpack.c.h.b16 %v145
    %v421 = vunpack.c.l.b16 %v146
    %v422 = vunpack.c.h.b16 %v146
    %v423 = vunpack.c.l.b16 %v147
    %v424 = vunpack.c.h.b16 %v147
    %v425 = vunpack.c.l.b16 %v148
    %v426 = vunpack.c.h.b16 %v148
    %v427 = vunpack.c.l.b16 %v149
    %v428 = vunpack.c.h.b16 %v149
    %v429 = vunpack.c.l.b16 %v150
    %v430 = vunpack.c.h.b16 %v150
    %v431 = vunpack.c.l.b16 %v151
    %v432 = vunpack.c.h.b16 %v151
    %v433 = vunpack.c.l.b16 %v152
    %v434 = vunpack.c.h.b16 %v152
    %v435 = vunpack.c.l.b16 %v153
    %v436 = vunpack.c.h.b16 %v153
    %v437 = vunpack.c.l.b16 %v154
    %v438 = vunpack.c.h.b16 %v154
    %v439 = vunpack.c.l.b16 %v155
    %v440 = vunpack.c.h.b16 %v155
    %v441 = vunpack.c.l.b16 %v156
    %v442 = vunpack.c.h.b16 %v156
    %v443 = vunpack.c.l.b16 %v157
    %v444 = vunpack.c.h.b16 %v157
    %v445 = vunpack.c.l.b16 %v158
    %v446 = vunpack.c.h.b16 %v158
    %v447 = vunpack.c.l.b16 %v159
    %v448 = vunpack.c.h.b16 %v159
    %v449 = vunpack.c.l.b16 %v160
    %v450 = vunpack.c.h.b16 %v160
    %v451 = vunpack.c.l.b16 %v161
    %v452 = vunpack.c.h.b16 %v161
    %v453 = vunpack.c.l.b16 %v162
    %v454 = vunpack.c.h.b16 %v162
    %v455 = vunpack.c.l.b16 %v163
    %v456 = vunpack.c.h.b16 %v163
    %v457 = vunpack.c.l.b16 %v164
    %v458 = vunpack.c.h.b16 %v164
    %v459 = vunpack.c.l.b16 %v165
    %v460 = vunpack.c.h.b16 %v165
    %v461 = vunpack.c.l.b16 %v166
    %v462 = vunpack.c.h.b16 %v166
    %v463 = vunpack.c.l.b16 %v167
    %v464 = vunpack.c.h.b16 %v167
    %v465 = vunpack.c.l.b16 %v168
    %v466 = vunpack.c.h.b16 %v168
    %v467 = vunpack.c.l.b16 %v169
    %v468 = vunpack.c.h.b16 %v169
    %v469 = vunpack.c.l.b16 %v170
    %v470 = vunpack.c.h.b16 %v170
    %v471 = vunpack.c.l.b16 %v171
    %v472 = vunpack.c.h.b16 %v171
    %v473 = vunpack.c.l.b16 %v172
    %v474 = vunpack.c.h.b16 %v172
    %v475 = vunpack.c.l.b16 %v173
    %v476 = vunpack.c.h.b16 %v173
    %v477 = vunpack.c.l.b16 %v174
    %v478 = vunpack.c.h.b16 %v174
    %v479 = vunpack.c.l.b16 %v175
    %v480 = vunpack.c.h.b16 %v175
    %v481 = vunpack.c.l.b16 %v176
    %v482 = vunpack.c.h.b16 %v176
    %v483 = vpack.c.b16 %v289, %v287
    %v484 = vpack.c.b16 %v290, %v288
    %v485 = vpack.c.b16 %v293, %v291
    %v486 = vpack.c.b16 %v294, %v292
    %v487 = vpack.c.b16 %v297, %v295
    %v488 = vpack.c.b16 %v298, %v296
    %v489 = vpack.c.b16 %v301, %v299
    %v490 = vpack.c.b16 %v302, %v300
    %v491 = vpack.c.b16 %v305, %v303
    %v492 = vpack.c.b16 %v306, %v304
    %v493 = vpack.c.b16 %v309, %v307
    %v494 = vpack.c.b16 %v310, %v308
    %v495 = vpack.c.b16 %v313, %v311
    %v496 = vpack.c.b16 %v314, %v312
    %v497 = vpack.c.b16 %v317, %v315
    %v498 = vpack.c.b16 %v318, %v316
    %v499 = vpack.c.b16 %v321, %v319
    %v500 = vpack.c.b16 %v322, %v320
    %v501 = vpack.c.b16 %v325, %v323
    %v502 = vpack.c.b16 %v326, %v324
    %v503 = vpack.c.b16 %v329, %v327
    %v504 = vpack.c.b16 %v330, %v328
    %v505 = vpack.c.b16 %v333, %v331
    %v506 = vpack.c.b16 %v334, %v332
    %v507 = vpack.c.b16 %v337, %v335
    %v508 = vpack.c.b16 %v338, %v336
    %v509 = vpack.c.b16 %v341, %v339
    %v510 = vpack.c.b16 %v342, %v340
    %v511 = vpack.c.b16 %v345, %v343
    %v512 = vpack.c.b16 %v346, %v344
    %v513 = vpack.c.b16 %v349, %v347
    %v514 = vpack.c.b16 %v350, %v348
    %v515 = vpack.c.b16 %v353, %v351
    %v516 = vpack.c.b16 %v354, %v352
    %v517 = vpack.c.b16 %v357, %v355
    %v518 = vpack.c.b16 %v358, %v356
    %v519 = vpack.c.b16 %v361, %v359
    %v520 = vpack.c.b16 %v362, %v360
    %v521 = vpack.c.b16 %v365, %v363
    %v522 = vpack.c.b16 %v366, %v364
    %v523 = vpack.c.b16 %v369, %v367
    %v524 = vpack.c.b16 %v370, %v368
    %v525 = vpack.c.b16 %v373, %v371
    %v526 = vpack.c.b16 %v374, %v372
    %v527 = vpack.c.b16 %v377, %v375
    %v528 = vpack.c.b16 %v378, %v376
    %v529 = vpack.c.b16 %v381, %v379
    %v530 = vpack.c.b16 %v382, %v380
    %v531 = vpack.c.b16 %v385, %v383
    %v532 = vpack.c.b16 %v386, %v384
    %v533 = vpack.c.b16 %v389, %v387
    %v534 = vpack.c.b16 %v390, %v388
    %v535 = vpack.c.b16 %v393, %v391
    %v536 = vpack.c.b16 %v394, %v392
    %v537 = vpack.c.b16 %v397, %v395
    %v538 = vpack.c.b16 %v398, %v396
    %v539 = vpack.c.b16 %v401, %v399
    %v540 = vpack.c.b16 %v402, %v400
    %v541 = vpack.c.b16 %v405, %v403
    %v542 = vpack.c.b16 %v406, %v404
    %v543 = vpack.c.b16 %v409, %v407
    %v544 = vpack.c.b16 %v410, %v408
    %v545 = vpack.c.b16 %v413, %v411
    %v546 = vpack.c.b16 %v414, %v412
    %v547 = vpack.c.b16 %v417, %v415
    %v548 = vpack.c.b16 %v418, %v416
    %v549 = vpack.c.b16 %v421, %v419
    %v550 = vpack.c.b16 %v422, %v420
    %v551 = vpack.c.b16 %v425, %v423
    %v552 = vpack.c.b16 %v426, %v424
    %v553 = vpack.c.b16 %v429, %v427
    %v554 = vpack.c.b16 %v430, %v428
    %v555 = vpack.c.b16 %v433, %v431
    %v556 = vpack.c.b16 %v434, %v432
    %v557 = vpack.c.b16 %v437, %v435
    %v558 = vpack.c.b16 %v438, %v436
    %v559 = vpack.c.b16 %v441, %v439
    %v560 = vpack.c.b16 %v442, %v440
    %v561 = vpack.c.b16 %v445, %v443
    %v562 = vpack.c.b16 %v446, %v444
    %v563 = vpack.c.b16 %v449, %v447
    %v564 = vpack.c.b16 %v450, %v448
    %v565 = vpack.c.b16 %v453, %v451
    %v566 = vpack.c.b16 %v454, %v452
    %v567 = vpack.c.b16 %v457, %v455
    %v568 = vpack.c.b16 %v458, %v456
    %v569 = vpack.c.b16 %v461, %v459
    %v570 = vpack.c.b16 %v462, %v460
    %v571 = vpack.c.b16 %v465, %v463
    %v572 = vpack.c.b16 %v466, %v464
    %v573 = vpack.c.b16 %v469, %v467
    %v574 = vpack.c.b16 %v470, %v468
    %v575 = vpack.c.b16 %v473, %v471
    %v576 = vpack.c.b16 %v474, %v472
    %v577 = vpack.c.b16 %v477, %v475
    %v578 = vpack.c.b16 %v478, %v476
    %v579 = vpack.c.b16 %v481, %v479
    %v580 = vpack.c.b16 %v482, %v480
    %vm679 = vcmask 130048
    %v681 = vsel %vm679, %v78, 0
    %683 = vmatprep.subr.bf16.mxu0 %v484
    %684 = vmatpush1.bf16.msra.mxu0 %v483
    %685 = vmatprep.subr.bf16.mxu0 %v486
    %686 = vmatpush1.bf16.msra.mxu0 %v485
    %687 = vmatprep.subr.bf16.mxu0 %v488
    %688 = vmatpush1.bf16.msra.mxu0 %v487
    %689 = vmatprep.subr.bf16.mxu0 %v490
    %690 = vmatpush1.bf16.msra.mxu0 %v489
    %691 = vmatprep.subr.bf16.mxu0 %v492
    %692 = vmatpush1.bf16.msra.mxu0 %v491
    %693 = vmatprep.subr.bf16.mxu0 %v494
    %694 = vmatpush1.bf16.msra.mxu0 %v493
    %695 = vmatprep.subr.bf16.mxu0 %v496
    %696 = vmatpush1.bf16.msra.mxu0 %v495
    %697 = vmatprep.subr.bf16.mxu0 %v498
    %698 = vmatpush1.bf16.msra.mxu0 %v497
    %699 = vmatprep.subr.bf16.mxu0 %v500
    %700 = vmatpush1.bf16.msra.mxu0 %v499
    %701 = vmatprep.subr.bf16.mxu0 %v502
    %702 = vmatpush1.bf16.msra.mxu0 %v501
    %703 = vmatprep.subr.bf16.mxu0 %v504
    %704 = vmatpush1.bf16.msra.mxu0 %v503
    %705 = vmatprep.subr.bf16.mxu0 %v506
    %706 = vmatpush1.bf16.msra.mxu0 %v505
    %707 = vmatprep.subr.bf16.mxu0 %v508
    %708 = vmatpush1.bf16.msra.mxu0 %v507
    %709 = vmatprep.subr.bf16.mxu0 %v510
    %710 = vmatpush1.bf16.msra.mxu0 %v509
    %711 = vmatprep.subr.bf16.mxu0 %v512
    %712 = vmatpush1.bf16.msra.mxu0 %v511
    %713 = vmatprep.subr.bf16.mxu0 %v514
    %714 = vmatpush1.bf16.msra.mxu0 %v513
    %715 = vmatprep.mubr.bf16.mxu0 %v73
    %716 = vmatmul.mubr.bf16.gmra.mrb[0].mxu0 %v72
    %v717 = vpop.f32.mrb[0].mxu0
    %v718 = vadd.f32 %v182, %v717
    %v719 = vpop.f32.mrb[0].mxu0
    %v720 = vadd.f32 %v186, %v719
    %v721 = vpop.f32.mrb[0].mxu0
    %v722 = vpop.f32.mrb[0].mxu0
    %723 = vdwg.mxu0
    %724 = vmatprep.subr.bf16.mxu0 %v516
    %725 = vmatpush1.bf16.msra.mxu0 %v515
    %726 = vmatprep.subr.bf16.mxu0 %v518
    %727 = vmatpush1.bf16.msra.mxu0 %v517
    %728 = vmatprep.subr.bf16.mxu0 %v520
    %729 = vmatpush1.bf16.msra.mxu0 %v519
    %730 = vmatprep.subr.bf16.mxu0 %v522
    %731 = vmatpush1.bf16.msra.mxu0 %v521
    %732 = vmatprep.subr.bf16.mxu0 %v524
    %733 = vmatpush1.bf16.msra.mxu0 %v523
    %734 = vmatprep.subr.bf16.mxu0 %v526
    %735 = vmatpush1.bf16.msra.mxu0 %v525
    %736 = vmatprep.subr.bf16.mxu0 %v528
    %737 = vmatpush1.bf16.msra.mxu0 %v527
    %738 = vmatprep.subr.bf16.mxu0 %v530
    %739 = vmatpush1.bf16.msra.mxu0 %v529
    %740 = vmatprep.subr.bf16.mxu0 %v532
    %741 = vmatpush1.bf16.msra.mxu0 %v531
    %742 = vmatprep.subr.bf16.mxu0 %v534
    %743 = vmatpush1.bf16.msra.mxu0 %v533
    %744 = vmatprep.subr.bf16.mxu0 %v536
    %745 = vmatpush1.bf16.msra.mxu0 %v535
    %746 = vmatprep.subr.bf16.mxu0 %v538
    %747 = vmatpush1.bf16.msra.mxu0 %v537
    %748 = vmatprep.subr.bf16.mxu0 %v540
    %749 = vmatpush1.bf16.msra.mxu0 %v539
    %750 = vmatprep.subr.bf16.mxu0 %v542
    %751 = vmatpush1.bf16.msra.mxu0 %v541
    %752 = vmatprep.subr.bf16.mxu0 %v544
    %753 = vmatpush1.bf16.msra.mxu0 %v543
    %754 = vmatprep.subr.bf16.mxu0 %v546
    %755 = vmatpush1.bf16.msra.mxu0 %v545
    %756 = vmatprep.mubr.bf16.mxu0 %v75
    %757 = vmatmul.mubr.bf16.gmra.mrb[0].mxu0 %v74
    %v758 = vpop.f32.mrb[0].mxu0
    %v759 = vadd.f32 %v718, %v758
    %v760 = vpop.f32.mrb[0].mxu0
    %v761 = vadd.f32 %v720, %v760
    %v762 = vpop.f32.mrb[0].mxu0
    %v763 = vpop.f32.mrb[0].mxu0
    %764 = vdwg.mxu0
    %765 = vmatprep.subr.bf16.mxu0 %v548
    %766 = vmatpush1.bf16.msra.mxu0 %v547
    %767 = vmatprep.subr.bf16.mxu0 %v550
    %768 = vmatpush1.bf16.msra.mxu0 %v549
    %769 = vmatprep.subr.bf16.mxu0 %v552
    %770 = vmatpush1.bf16.msra.mxu0 %v551
    %771 = vmatprep.subr.bf16.mxu0 %v554
    %772 = vmatpush1.bf16.msra.mxu0 %v553
    %773 = vmatprep.subr.bf16.mxu0 %v556
    %774 = vmatpush1.bf16.msra.mxu0 %v555
    %775 = vmatprep.subr.bf16.mxu0 %v558
    %776 = vmatpush1.bf16.msra.mxu0 %v557
    %777 = vmatprep.subr.bf16.mxu0 %v560
    %778 = vmatpush1.bf16.msra.mxu0 %v559
    %779 = vmatprep.subr.bf16.mxu0 %v562
    %780 = vmatpush1.bf16.msra.mxu0 %v561
    %781 = vmatprep.subr.bf16.mxu0 %v564
    %782 = vmatpush1.bf16.msra.mxu0 %v563
    %783 = vmatprep.subr.bf16.mxu0 %v566
    %784 = vmatpush1.bf16.msra.mxu0 %v565
    %785 = vmatprep.subr.bf16.mxu0 %v568
    %786 = vmatpush1.bf16.msra.mxu0 %v567
    %787 = vmatprep.subr.bf16.mxu0 %v570
    %788 = vmatpush1.bf16.msra.mxu0 %v569
    %789 = vmatprep.subr.bf16.mxu0 %v572
    %790 = vmatpush1.bf16.msra.mxu0 %v571
    %791 = vmatprep.subr.bf16.mxu0 %v574
    %792 = vmatpush1.bf16.msra.mxu0 %v573
    %793 = vmatprep.subr.bf16.mxu0 %v576
    %794 = vmatpush1.bf16.msra.mxu0 %v575
    %795 = vmatprep.subr.bf16.mxu0 %v578
    %796 = vmatpush1.bf16.msra.mxu0 %v577
    %797 = vmatprep.mubr.bf16.mxu0 %v77
    %798 = vmatmul.mubr.bf16.gmra.mrb[0].mxu0 %v76
    %v799 = vpop.f32.mrb[0].mxu0
    %v800 = vadd.f32 %v759, %v799
    %v801 = vpop.f32.mrb[0].mxu0
    %v802 = vadd.f32 %v761, %v801
    %v803 = vpop.f32.mrb[0].mxu0
    %v804 = vpop.f32.mrb[0].mxu0
    %805 = vdwg.mxu0
    %806 = vmatprep.subr.bf16.mxu0 %v580
    %807 = vmatpush1.bf16.msra.mxu0 %v579
    %808 = vmatprep.subr.bf16.mxu0 0
    %809 = vmatpush1.bf16.msra.mxu0 0
    %810 = vmatprep.subr.bf16.mxu0 0
    %811 = vmatpush1.bf16.msra.mxu0 0
    %812 = vmatprep.subr.bf16.mxu0 0
    %813 = vmatpush1.bf16.msra.mxu0 0
    %814 = vmatprep.subr.bf16.mxu0 0
    %815 = vmatpush1.bf16.msra.mxu0 0
    %816 = vmatprep.subr.bf16.mxu0 0
    %817 = vmatpush1.bf16.msra.mxu0 0
    %818 = vmatprep.subr.bf16.mxu0 0
    %819 = vmatpush1.bf16.msra.mxu0 0
    %820 = vmatprep.subr.bf16.mxu0 0
    %821 = vmatpush1.bf16.msra.mxu0 0
    %822 = vmatprep.subr.bf16.mxu0 0
    %823 = vmatpush1.bf16.msra.mxu0 0
    %824 = vmatprep.subr.bf16.mxu0 0
    %825 = vmatpush1.bf16.msra.mxu0 0
    %826 = vmatprep.subr.bf16.mxu0 0
    %827 = vmatpush1.bf16.msra.mxu0 0
    %828 = vmatprep.subr.bf16.mxu0 0
    %829 = vmatpush1.bf16.msra.mxu0 0
    %830 = vmatprep.subr.bf16.mxu0 0
    %831 = vmatpush1.bf16.msra.mxu0 0
    %832 = vmatprep.subr.bf16.mxu0 0
    %833 = vmatpush1.bf16.msra.mxu0 0
    %834 = vmatprep.subr.bf16.mxu0 0
    %835 = vmatpush1.bf16.msra.mxu0 0
    %836 = vmatprep.subr.bf16.mxu0 0
    %837 = vmatpush1.bf16.msra.mxu0 0
    %838 = vmatprep.mubr.bf16.mxu0 0
    %839 = vmatmul.mubr.bf16.gmra.mrb[0].mxu0 %v681
    %v840 = vpop.f32.mrb[0].mxu0
    %v841 = vadd.f32 %v800, %v840
    %v842 = vpop.f32.mrb[0].mxu0
    %v843 = vadd.f32 %v802, %v842
    %v844 = vpop.f32.mrb[0].mxu0
    %v845 = vpop.f32.mrb[0].mxu0
    %846 = vdwg.mxu0
    %v847 = vmax.f32 %v841, 0.0
    %v848 = vmax.f32 %v843, 0.0
    %v849 = vpack.c.bf16 %v847, %v847
    %v850 = vpack.c.bf16 %v848, %v848
    %v851 = vld [vmem:[#allocation5] sm:$0xf]
    %v852 = vld [vmem:[#allocation5 + $0x4] sm:$0xf]
    %v853 = vld [vmem:[#allocation5 + $0x8] sm:$0xf]
    %v854 = vld [vmem:[#allocation5 + $0xc] sm:$0xf]
    %v855 = vld [vmem:[#allocation5 + $0x10] sm:$0xf]
    %v856 = vld [vmem:[#allocation5 + $0x14] sm:$0xf]
    %v857 = vld [vmem:[#allocation5 + $0x18] sm:$0xf]
    %v858 = vld [vmem:[#allocation5 + $0x1c] sm:$0xf]
    %v859 = vld [vmem:[#allocation5 + $0x20] sm:$0xf]
    %v860 = vld [vmem:[#allocation5 + $0x24] sm:$0xf]
    %v861 = vld [vmem:[#allocation5 + $0x28] sm:$0xf]
    %v862 = vld [vmem:[#allocation5 + $0x2c] sm:$0xf]
    %v863 = vld [vmem:[#allocation5 + $0x30] sm:$0xf]
    %v864 = vld [vmem:[#allocation5 + $0x34] sm:$0xf]
    %v865 = vld [vmem:[#allocation5 + $0x38] sm:$0xf]
    %v866 = vld [vmem:[#allocation5 + $0x3c] sm:$0xf]
    %v867 = vld [vmem:[#allocation5 + $0x40] sm:$0xf]
    %v868 = vld [vmem:[#allocation5 + $0x44] sm:$0xf]
    %v869 = vld [vmem:[#allocation5 + $0x48] sm:$0xf]
    %v870 = vld [vmem:[#allocation5 + $0x4c] sm:$0xf]
    %v871 = vld [vmem:[#allocation5 + $0x50] sm:$0xf]
    %v872 = vld [vmem:[#allocation5 + $0x54] sm:$0xf]
    %v873 = vld [vmem:[#allocation5 + $0x58] sm:$0xf]
    %v874 = vld [vmem:[#allocation5 + $0x5c] sm:$0xf]
    %v875 = vld [vmem:[#allocation5 + $0x60] sm:$0xf]
    %v876 = vld [vmem:[#allocation5 + $0x64] sm:$0xf]
    %v877 = vld [vmem:[#allocation5 + $0x68] sm:$0xf]
    %v878 = vld [vmem:[#allocation5 + $0x6c] sm:$0xf]
    %v879 = vld [vmem:[#allocation5 + $0x70] sm:$0xf]
    %v880 = vld [vmem:[#allocation5 + $0x74] sm:$0xf]
    %v881 = vld [vmem:[#allocation5 + $0x78] sm:$0xf]
    %v882 = vld [vmem:[#allocation5 + $0x7c] sm:$0xf]
    %v883 = vld [vmem:[%s4] sm:$0x1]
    %v885 = vlaneseq
    %v886 = vshrl.u32 %v885, 7
    %v887 = vsub.s32 0, %v886
    %v888 = vrot.slane %v883, %v887
    %v922 = vunpack.c.l.b16 %v851
    %v923 = vunpack.c.l.b16 %v852
    %v924 = vunpack.c.l.b16 %v853
    %v925 = vunpack.c.l.b16 %v854
    %v926 = vunpack.c.l.b16 %v855
    %v927 = vunpack.c.l.b16 %v856
    %v928 = vunpack.c.l.b16 %v857
    %v929 = vunpack.c.l.b16 %v858
    %v930 = vunpack.c.l.b16 %v859
    %v931 = vunpack.c.l.b16 %v860
    %v932 = vunpack.c.l.b16 %v861
    %v933 = vunpack.c.l.b16 %v862
    %v934 = vunpack.c.l.b16 %v863
    %v935 = vunpack.c.l.b16 %v864
    %v936 = vunpack.c.l.b16 %v865
    %v937 = vunpack.c.l.b16 %v866
    %v938 = vunpack.c.l.b16 %v867
    %v939 = vunpack.c.l.b16 %v868
    %v940 = vunpack.c.l.b16 %v869
    %v941 = vunpack.c.l.b16 %v870
    %v942 = vunpack.c.l.b16 %v871
    %v943 = vunpack.c.l.b16 %v872
    %v944 = vunpack.c.l.b16 %v873
    %v945 = vunpack.c.l.b16 %v874
    %v946 = vunpack.c.l.b16 %v875
    %v947 = vunpack.c.l.b16 %v876
    %v948 = vunpack.c.l.b16 %v877
    %v949 = vunpack.c.l.b16 %v878
    %v950 = vunpack.c.l.b16 %v879
    %v951 = vunpack.c.l.b16 %v880
    %v952 = vunpack.c.l.b16 %v881
    %v953 = vunpack.c.l.b16 %v882
    %v954 = vpack.c.b16 %v923, %v922
    %v955 = vpack.c.b16 %v925, %v924
    %v956 = vpack.c.b16 %v927, %v926
    %v957 = vpack.c.b16 %v929, %v928
    %v958 = vpack.c.b16 %v931, %v930
    %v959 = vpack.c.b16 %v933, %v932
    %v960 = vpack.c.b16 %v935, %v934
    %v961 = vpack.c.b16 %v937, %v936
    %v962 = vpack.c.b16 %v939, %v938
    %v963 = vpack.c.b16 %v941, %v940
    %v964 = vpack.c.b16 %v943, %v942
    %v965 = vpack.c.b16 %v945, %v944
    %v966 = vpack.c.b16 %v947, %v946
    %v967 = vpack.c.b16 %v949, %v948
    %v968 = vpack.c.b16 %v951, %v950
    %v969 = vpack.c.b16 %v953, %v952
    %986 = vmatprep.subr.bf16.mxu0 0
    %987 = vmatpush1.bf16.msra.mxu0 %v954
    %988 = vmatprep.subr.bf16.mxu0 0
    %989 = vmatpush1.bf16.msra.mxu0 %v955
    %990 = vmatprep.subr.bf16.mxu0 0
    %991 = vmatpush1.bf16.msra.mxu0 %v956
    %992 = vmatprep.subr.bf16.mxu0 0
    %993 = vmatpush1.bf16.msra.mxu0 %v957
    %994 = vmatprep.subr.bf16.mxu0 0
    %995 = vmatpush1.bf16.msra.mxu0 %v958
    %996 = vmatprep.subr.bf16.mxu0 0
    %997 = vmatpush1.bf16.msra.mxu0 %v959
    %998 = vmatprep.subr.bf16.mxu0 0
    %999 = vmatpush1.bf16.msra.mxu0 %v960
    %1000 = vmatprep.subr.bf16.mxu0 0
    %1001 = vmatpush1.bf16.msra.mxu0 %v961
    %1002 = vmatprep.subr.bf16.mxu0 0
    %1003 = vmatpush1.bf16.msra.mxu0 %v962
    %1004 = vmatprep.subr.bf16.mxu0 0
    %1005 = vmatpush1.bf16.msra.mxu0 %v963
    %1006 = vmatprep.subr.bf16.mxu0 0
    %1007 = vmatpush1.bf16.msra.mxu0 %v964
    %1008 = vmatprep.subr.bf16.mxu0 0
    %1009 = vmatpush1.bf16.msra.mxu0 %v965
    %1010 = vmatprep.subr.bf16.mxu0 0
    %1011 = vmatpush1.bf16.msra.mxu0 %v966
    %1012 = vmatprep.subr.bf16.mxu0 0
    %1013 = vmatpush1.bf16.msra.mxu0 %v967
    %1014 = vmatprep.subr.bf16.mxu0 0
    %1015 = vmatpush1.bf16.msra.mxu0 %v968
    %1016 = vmatprep.subr.bf16.mxu0 0
    %1017 = vmatpush1.bf16.msra.mxu0 %v969
    %1018 = vmatprep.mubr.bf16.mxu0 %v850
    %1019 = vmatmul.mubr.bf16.gmra.mrb[0].mxu0 %v849
    %v1020 = vpop.f32.mrb[0].mxu0
    %v1021 = vadd.f32 %v888, %v1020
    %v1022 = vpop.f32.mrb[0].mxu0
    %v1023 = vpop.f32.mrb[0].mxu0
    %v1024 = vpop.f32.mrb[0].mxu0
    %1025 = vdwg.mxu0
    %v1026 = vmax.f32 %v1021, 0.0
    %v1027 = vpack.c.bf16 %v1026, %v1026
    %v1028 = vld [vmem:[%s5] sm:$0xf]
    %v1029 = vld [vmem:[%s5 + $0x4] sm:$0xf]
    %v1030 = vld [vmem:[%s5 + $0x8] sm:$0xf]
    %v1031 = vld [vmem:[%s5 + $0xc] sm:$0xf]
    %v1032 = vld [vmem:[%s5 + $0x10] sm:$0xf]
    %v1033 = vld [vmem:[%s5 + $0x14] sm:$0xf]
    %v1034 = vld [vmem:[%s5 + $0x18] sm:$0xf]
    %v1035 = vld [vmem:[%s5 + $0x1c] sm:$0xf]
    %v1036 = vld [vmem:[%s5 + $0x20] sm:$0xf]
    %v1037 = vld [vmem:[%s5 + $0x24] sm:$0xf]
    %v1038 = vld [vmem:[%s5 + $0x28] sm:$0xf]
    %v1039 = vld [vmem:[%s5 + $0x2c] sm:$0xf]
    %v1040 = vld [vmem:[%s5 + $0x30] sm:$0xf]
    %v1041 = vld [vmem:[%s5 + $0x34] sm:$0xf]
    %v1042 = vld [vmem:[%s5 + $0x38] sm:$0xf]
    %v1043 = vld [vmem:[%s5 + $0x3c] sm:$0xf]
    %v1044 = vld [vmem:[%s6] sm:$0x1]
    %v1046 = vlaneseq
    %v1047 = vshrl.u32 %v1046, 7
    %v1048 = vsub.s32 0, %v1047
    %v1049 = vrot.slane %v1044, %v1048
    %v1067 = vunpack.c.l.b16 %v1028
    %v1068 = vunpack.c.l.b16 %v1029
    %v1069 = vunpack.c.l.b16 %v1030
    %v1070 = vunpack.c.l.b16 %v1031
    %v1071 = vunpack.c.l.b16 %v1032
    %v1072 = vunpack.c.l.b16 %v1033
    %v1073 = vunpack.c.l.b16 %v1034
    %v1074 = vunpack.c.l.b16 %v1035
    %v1075 = vunpack.c.l.b16 %v1036
    %v1076 = vunpack.c.l.b16 %v1037
    %v1077 = vunpack.c.l.b16 %v1038
    %v1078 = vunpack.c.l.b16 %v1039
    %v1079 = vunpack.c.l.b16 %v1040
    %v1080 = vunpack.c.l.b16 %v1041
    %v1081 = vunpack.c.l.b16 %v1042
    %v1082 = vunpack.c.l.b16 %v1043
    %v1083 = vpack.c.b16 %v1068, %v1067
    %v1084 = vpack.c.b16 %v1070, %v1069
    %v1085 = vpack.c.b16 %v1072, %v1071
    %v1086 = vpack.c.b16 %v1074, %v1073
    %v1087 = vpack.c.b16 %v1076, %v1075
    %v1088 = vpack.c.b16 %v1078, %v1077
    %v1089 = vpack.c.b16 %v1080, %v1079
    %v1090 = vpack.c.b16 %v1082, %v1081
    %1099 = vmatprep.subr.bf16.mxu0 0
    %1100 = vmatpush1.bf16.msra.mxu0 %v1083
    %1101 = vmatprep.subr.bf16.mxu0 0
    %1102 = vmatpush1.bf16.msra.mxu0 %v1084
    %1103 = vmatprep.subr.bf16.mxu0 0
    %1104 = vmatpush1.bf16.msra.mxu0 %v1085
    %1105 = vmatprep.subr.bf16.mxu0 0
    %1106 = vmatpush1.bf16.msra.mxu0 %v1086
    %1107 = vmatprep.subr.bf16.mxu0 0
    %1108 = vmatpush1.bf16.msra.mxu0 %v1087
    %1109 = vmatprep.subr.bf16.mxu0 0
    %1110 = vmatpush1.bf16.msra.mxu0 %v1088
    %1111 = vmatprep.subr.bf16.mxu0 0
    %1112 = vmatpush1.bf16.msra.mxu0 %v1089
    %1113 = vmatprep.subr.bf16.mxu0 0
    %1114 = vmatpush1.bf16.msra.mxu0 %v1090
    %1115 = vmatprep.subr.bf16.mxu0 0
    %1116 = vmatpush1.bf16.msra.mxu0 0
    %1117 = vmatprep.subr.bf16.mxu0 0
    %1118 = vmatpush1.bf16.msra.mxu0 0
    %1119 = vmatprep.subr.bf16.mxu0 0
    %1120 = vmatpush1.bf16.msra.mxu0 0
    %1121 = vmatprep.subr.bf16.mxu0 0
    %1122 = vmatpush1.bf16.msra.mxu0 0
    %1123 = vmatprep.subr.bf16.mxu0 0
    %1124 = vmatpush1.bf16.msra.mxu0 0
    %1125 = vmatprep.subr.bf16.mxu0 0
    %1126 = vmatpush1.bf16.msra.mxu0 0
    %1127 = vmatprep.subr.bf16.mxu0 0
    %1128 = vmatpush1.bf16.msra.mxu0 0
    %1129 = vmatprep.subr.bf16.mxu0 0
    %1130 = vmatpush1.bf16.msra.mxu0 0
    %1131 = vmatprep.mubr.bf16.mxu0 0
    %1132 = vmatmul.mubr.bf16.gmra.mrb[0].mxu0 %v1027
    %v1133 = vpop.f32.mrb[0].mxu0
    %v1134 = vadd.f32 %v1049, %v1133
    %v1135 = vpop.f32.mrb[0].mxu0
    %v1136 = vpop.f32.mrb[0].mxu0
    %v1137 = vpop.f32.mrb[0].mxu0
    %1138 = vdwg.mxu0
    %v1139 = vmax.f32 %v1134, 0.0
    %v1140 = vpack.c.bf16 %v1139, %v1139
    %v1141 = vld [vmem:[%s7] sm:$0xf]
    %v1142 = vld [vmem:[%s7 + $0x4] sm:$0xf]
    %v1143 = vld [vmem:[%s7 + $0x8] sm:$0xf]
    %v1144 = vld [vmem:[%s7 + $0xc] sm:$0xf]
    %v1145 = vld [vmem:[%s7 + $0x10] sm:$0xf]
    %v1146 = vld [vmem:[%s7 + $0x14] sm:$0xf]
    %v1147 = vld [vmem:[%s7 + $0x18] sm:$0xf]
    %v1148 = vld [vmem:[%s7 + $0x1c] sm:$0xf]
    %v1149 = vld [vmem:[%s8] sm:$0x1]
    %v1151 = vlaneseq
    %v1152 = vshrl.u32 %v1151, 7
    %v1153 = vsub.s32 0, %v1152
    %v1154 = vrot.slane %v1149, %v1153
    %v1164 = vunpack.c.l.b16 %v1141
    %v1165 = vunpack.c.l.b16 %v1142
    %v1166 = vunpack.c.l.b16 %v1143
    %v1167 = vunpack.c.l.b16 %v1144
    %v1168 = vunpack.c.l.b16 %v1145
    %v1169 = vunpack.c.l.b16 %v1146
    %v1170 = vunpack.c.l.b16 %v1147
    %v1171 = vunpack.c.l.b16 %v1148
    %v1172 = vpack.c.b16 %v1165, %v1164
    %v1173 = vpack.c.b16 %v1167, %v1166
    %v1174 = vpack.c.b16 %v1169, %v1168
    %v1175 = vpack.c.b16 %v1171, %v1170
    %vm1180 = vcmask 523264
    %v1182 = vsel %vm1180, %v1140, 0
    %1184 = vmatprep.subr.bf16.mxu0 0
    %1185 = vmatpush1.bf16.msra.mxu0 %v1172
    %1186 = vmatprep.subr.bf16.mxu0 0
    %1187 = vmatpush1.bf16.msra.mxu0 %v1173
    %1188 = vmatprep.subr.bf16.mxu0 0
    %1189 = vmatpush1.bf16.msra.mxu0 %v1174
    %1190 = vmatprep.subr.bf16.mxu0 0
    %1191 = vmatpush1.bf16.msra.mxu0 %v1175
    %1192 = vmatprep.subr.bf16.mxu0 0
    %1193 = vmatpush1.bf16.msra.mxu0 0
    %1194 = vmatprep.subr.bf16.mxu0 0
    %1195 = vmatpush1.bf16.msra.mxu0 0
    %1196 = vmatprep.subr.bf16.mxu0 0
    %1197 = vmatpush1.bf16.msra.mxu0 0
    %1198 = vmatprep.subr.bf16.mxu0 0
    %1199 = vmatpush1.bf16.msra.mxu0 0
    %1200 = vmatprep.subr.bf16.mxu0 0
    %1201 = vmatpush1.bf16.msra.mxu0 0
    %1202 = vmatprep.subr.bf16.mxu0 0
    %1203 = vmatpush1.bf16.msra.mxu0 0
    %1204 = vmatprep.subr.bf16.mxu0 0
    %1205 = vmatpush1.bf16.msra.mxu0 0
    %1206 = vmatprep.subr.bf16.mxu0 0
    %1207 = vmatpush1.bf16.msra.mxu0 0
    %1208 = vmatprep.subr.bf16.mxu0 0
    %1209 = vmatpush1.bf16.msra.mxu0 0
    %1210 = vmatprep.subr.bf16.mxu0 0
    %1211 = vmatpush1.bf16.msra.mxu0 0
    %1212 = vmatprep.subr.bf16.mxu0 0
    %1213 = vmatpush1.bf16.msra.mxu0 0
    %1214 = vmatprep.subr.bf16.mxu0 0
    %1215 = vmatpush1.bf16.msra.mxu0 0
    %1216 = vmatprep.mubr.bf16.mxu0 0
    %1217 = vmatmul.mubr.bf16.gmra.mrb[0].mxu0 %v1182
    %v1218 = vpop.f32.mrb[0].mxu0
    %v1219 = vadd.f32 %v1154, %v1218
    %v1220 = vpop.f32.mrb[0].mxu0
    %v1221 = vpop.f32.mrb[0].mxu0
    %v1222 = vpop.f32.mrb[0].mxu0
    %1223 = vdwg.mxu0
    %v1224 = vmax.f32 %v1219, 0.0
    %v1225 = vld [vmem:[%s9] sm:$0x1]
    %v1227 = vlaneseq
    %v1228 = vshrl.u32 %v1227, 7
    %v1229 = vsub.s32 0, %v1228
    %v1230 = vrot.slane %v1225, %v1229
    %v1232 = vadd.f32 %v1224, %v1230
    %1233 = vmax.xlane.f32.xlu0 %v1232
    %v1234 = vpop.xlane.xlu0 %1233
    %v1235 = vsub.f32 %v1232, %v1234
    %v1236 = vmul.f32 %v1235, 1.442695
    %v1237 = vpow.pop %v1236
    %1238 = vadd.xlane.f32.xlu0 %v1237
    %v1239 = vpop.xlane.xlu0 %1238
    %v1240 = vrcp.pop %v1239
    %v1241 = vmul.f32 %v1237, %v1240
    %1242 = vst [vmem:[#allocation7] sm:$0xff] %v1241
    // Predicated region
    $region50: #{tpu_custom_call.1} parent=1 // pred_check
      _
    $region51: #{tpu_custom_call.1} parent=1 // pred_check_branch
      %1244 = sbr.rel (0) target = $region53
    $region52: #{tpu_custom_call.1} parent=1 // pred_region
      %s1246 = ssub.s32 128, 128
      %1247 = vsyncadd [#allocation4], %s1246
      %s1249 = sshll.u32 [#allocation7], 4
      %s1250 = int_to_ptr.vmem [resolvable:$true] %s1249
      %1252 = dma.vmem_to_hbm [thread:$0]  %s1250, 128, %s10, [#allocation4]
    $region53: #{tpu_custom_call.1} parent=1 // pred_fallthru
      _
    // Predicated region
    $region54: #{tpu_custom_call.1} parent=1 // pred_check
      _
    $region55: #{tpu_custom_call.1} parent=1 // pred_check_branch
      %1254 = sbr.rel (0) target = $region57
    $region56: #{tpu_custom_call.1} parent=1 // pred_region
      %1255 = dma.done [#allocation4], 128
    $region57: #{tpu_custom_call.1} parent=1 // pred_fallthru
      _
    %1256 = vsyncpa [#allocation3], 1
    %1257 = vsyncpa [#allocation6], 1
    %1258 = vsyncpa [#allocation4], 1

</llo_original>
